<compile_context>
chip_gen: v5e
topology: v5e:2x2
jax: 0.10.0
libtpu: 0.0.40
codegen_flags: <defaults>
</compile_context>

<pallas_src>
import math

import jax
import jax.numpy as jnp
from jax.experimental import pallas as pl
from jax.experimental.pallas import tpu as pltpu


_SUBLANE = 8
_LANE = 128
# Total VMEM bytes budgeted for the double-buffered x/out streaming buffers.
_DEFAULT_VMEM_BUDGET = 8 * 1024 * 1024
# Fuse the gate MLP into the streaming kernel only if its weights stay this small.
_FUSE_WEIGHT_LIMIT = 4 * 1024 * 1024


# ---------------------------------------------------------------------------
# Gate MLP math (shared by the fused and two-pass kernels).  Matches PyTorch:
#   Linear -> LayerNorm(eps=1e-5, biased var, affine) -> GELU(erf) -> Linear -> Sigmoid
# ---------------------------------------------------------------------------
def _gate_mlp_f32(e, w1, b1, gamma, beta, w2, b2):
    f32 = jnp.float32
    e, w1, b1 = e.astype(f32), w1.astype(f32), b1.astype(f32)
    gamma, beta = gamma.astype(f32), beta.astype(f32)
    w2, b2 = w2.astype(f32), b2.astype(f32)

    h = jnp.dot(e, w1, preferred_element_type=f32) + b1                   # (1, H)
    mean = jnp.mean(h, axis=-1, keepdims=True)
    var = jnp.mean((h - mean) * (h - mean), axis=-1, keepdims=True)
    h = (h - mean) * jax.lax.rsqrt(var + f32(1e-5))
    h = h * gamma + beta
    # Exact GELU (erf form) == torch.nn.GELU(approximate='none')
    h = 0.5 * h * (1.0 + jax.lax.erf(h * f32(0.7071067811865476)))
    g = jnp.dot(h, w2, preferred_element_type=f32) + b2                   # (1, C)
    return jax.nn.sigmoid(g)


# ---------------------------------------------------------------------------
# Fused kernel: gate MLP from VMEM-resident weights + streaming broadcast multiply.
# The recomputed gate per grid step is negligible compute hidden under the tile DMA.
# ---------------------------------------------------------------------------
def _fused_gate_mul_kernel(emotion_ref, w1_ref, b1_ref, gamma_ref, beta_ref,
                           w2_ref, b2_ref, x_ref, out_ref):
    gate = _gate_mlp_f32(emotion_ref[...], w1_ref[...], b1_ref[...],
                         gamma_ref[...], beta_ref[...], w2_ref[...], b2_ref[...])
    # Multiply in x's native dtype (f32 path is a no-op cast).
    out_ref[...] = x_ref[...] * gate.astype(x_ref.dtype)


# ---------------------------------------------------------------------------
# Two-pass fallback (only when the encoder weights are too big to keep resident):
# one-shot gate kernel + streaming multiply with a VMEM-resident (1, C) gate.
# ---------------------------------------------------------------------------
def _gate_mlp_kernel(emotion_ref, w1_ref, b1_ref, gamma_ref, beta_ref,
                     w2_ref, b2_ref, gate_ref):
    gate_ref[...] = _gate_mlp_f32(
        emotion_ref[...], w1_ref[...], b1_ref[...], gamma_ref[...],
        beta_ref[...], w2_ref[...], b2_ref[...]).astype(gate_ref.dtype)


def _apply_gate_kernel(gate_ref, x_ref, out_ref):
    out_ref[...] = x_ref[...] * gate_ref[...]


# ---------------------------------------------------------------------------
# Tile-size selection: VMEM-budget- and column-aware, >= 2 grid steps when possible.
# ---------------------------------------------------------------------------
def _choose_block_rows(rows, cols, itemsize, budget_bytes):
    if rows <= _SUBLANE:
        return rows                                   # full dim -> always legal
    per_buf = max(budget_bytes // 4, _SUBLANE * cols * itemsize)
    tb = (per_buf // (cols * itemsize)) // _SUBLANE * _SUBLANE
    tb = max(_SUBLANE, tb)
    # Keep at least 2 grid steps (when the array supports it) so both v7x
    # TensorCores stream; no-op on v5e/v6e (single TC).
    if rows < 2 * tb and rows > 2 * _SUBLANE:
        half = (-(-rows // 2) + _SUBLANE - 1) // _SUBLANE * _SUBLANE
        tb = min(tb, max(_SUBLANE, half))
    rows_up = (rows + _SUBLANE - 1) // _SUBLANE * _SUBLANE
    return min(tb, rows_up)


# ---------------------------------------------------------------------------
# Public wrapper.
# ---------------------------------------------------------------------------
def emotional_gate(x, emotion_vec, params, *,
                   vmem_budget_bytes=_DEFAULT_VMEM_BUDGET, fuse=True):
    """x: (B, state_dim); emotion_vec: (1, emotion_dim); params: dict of 2-D weights
    (pre-transposed to (in, out))."""
    B, S = x.shape
    itemsize = x.dtype.itemsize
    n = B * S

    # ---- choose a lane-dense layout --------------------------------------
    if S % _LANE == 0:
        x2d = x                                        # (B, S): already lane-dense
        reps, pad = 1, 0
    else:
        C = (S * _LANE) // math.gcd(S, _LANE)          # lcm(S, 128)
        per_buf = max(vmem_budget_bytes // 4, 1)
        if C * _SUBLANE * itemsize <= per_buf:
            reps = C // S
            pad = (-n) % C
            x_flat = x.reshape(-1)                     # row-major: free
            if pad:
                x_flat = jnp.pad(x_flat, (0, pad))     # cheap one-time XLA pad
            x2d = x_flat.reshape(-1, C)
        else:
            # TODO(synk): enormous state_dim not divisible by 128 -- keep the (B, S)
            # tiling; only the last partial 128-lane chunk of each row is masked.
            x2d = x
            reps, pad = 1, 0

    rows, cols = x2d.shape
    tb = _choose_block_rows(rows, cols, itemsize, vmem_budget_bytes)
    grid = (pl.cdiv(rows, tb),)

    # Tile the second Linear to the lane-dense width so the gate comes out (1, cols).
    w2, b2 = params["w2"], params["b2"]
    if reps > 1:
        w2 = jnp.tile(w2, (1, reps))
        b2 = jnp.tile(b2, (1, reps))
    small_args = (emotion_vec, params["w1"], params["b1"],
                  params["gamma"], params["beta"], w2, b2)
    weight_bytes = sum(int(a.size) * a.dtype.itemsize for a in small_args)

    x_spec = pl.BlockSpec((tb, cols), lambda i: (i, 0))
    out_spec = pl.BlockSpec((tb, cols), lambda i: (i, 0))
    compiler_params = pltpu.CompilerParams(dimension_semantics=("parallel",))
    hidden = params["w1"].shape[1]
    cost = pl.CostEstimate(
        flops=int(rows * cols),
        transcendentals=int(grid[0] * (hidden + cols)),
        bytes_accessed=int(2 * rows * cols * itemsize + weight_bytes),
    )

    if fuse and weight_bytes <= _FUSE_WEIGHT_LIMIT:
        # Fused single launch: all weights VMEM-resident (block index never changes,
        # so they are DMA'd once); x/out are the only streamed arrays.
        small_specs = [pl.BlockSpec(a.shape, lambda i: (0, 0)) for a in small_args]
        out2d = pl.pallas_call(
            _fused_gate_mul_kernel,
            out_shape=jax.ShapeDtypeStruct((rows, cols), x.dtype),
            grid=grid,
            in_specs=small_specs + [x_spec],
            out_specs=out_spec,
            compiler_params=compiler_params,
            cost_estimate=cost,
        )(*small_args, x2d)
    else:
        # TODO(synk): a truly huge emotion encoder would itself need a tiled MLP; here
        # it is just hoisted into a one-shot kernel and the multiply is streamed.
        vmem = pl.BlockSpec(memory_space=pltpu.MemorySpace.VMEM)
        gate = pl.pallas_call(
            _gate_mlp_kernel,
            out_shape=jax.ShapeDtypeStruct((1, cols), x.dtype),
            in_specs=[vmem] * len(small_args),
            out_specs=vmem,
        )(*small_args)
        out2d = pl.pallas_call(
            _apply_gate_kernel,
            out_shape=jax.ShapeDtypeStruct((rows, cols), x.dtype),
            grid=grid,
            in_specs=[pl.BlockSpec((1, cols), lambda i: (0, 0)), x_spec],
            out_specs=out_spec,
            compiler_params=compiler_params,
            cost_estimate=cost,
        )(gate, x2d)

    if out2d.shape == (B, S):
        return out2d
    return out2d.reshape(-1)[:n].reshape(B, S)


# ---------------------------------------------------------------------------
# Pure-JAX reference (independent math) for correctness checking.
# ---------------------------------------------------------------------------
def emotional_gate_ref(x, emotion_vec, params):
    h = emotion_vec @ params["w1"] + params["b1"]
    mean = jnp.mean(h, axis=-1, keepdims=True)
    var = jnp.mean((h - mean) ** 2, axis=-1, keepdims=True)
    h = (h - mean) / jnp.sqrt(var + 1e-5)
    h = h * params["gamma"] + params["beta"]
    h = 0.5 * h * (1.0 + jax.lax.erf(h / jnp.sqrt(2.0)))
    g = jax.nn.sigmoid(h @ params["w2"] + params["b2"])
    return x * g


def _make_params(key, emotion_dim, hidden_dim, state_dim, dtype):
    k_w1, k_b1, k_w2, k_b2 = jax.random.split(key, 4)
    # Weights stored pre-transposed as (in, out) -- equivalent to nn.Linear(out, in).T
    return {
        "w1": jax.random.normal(k_w1, (emotion_dim, hidden_dim), dtype) * 0.1,
        "b1": jax.random.normal(k_b1, (1, hidden_dim), dtype) * 0.1,
        "gamma": jnp.ones((1, hidden_dim), dtype),
        "beta": jnp.zeros((1, hidden_dim), dtype),
        "w2": jax.random.normal(k_w2, (hidden_dim, state_dim), dtype) * 0.1,
        "b2": jax.random.normal(k_b2, (1, state_dim), dtype) * 0.1,
    }


if __name__ == "__main__":
    dtype = jnp.float32
    emotion_dim, hidden_dim, state_dim = 8, 32, 32

    key = jax.random.PRNGKey(0)
    k_p, k_p2, k_e, k_x1, k_x2, k_x3 = jax.random.split(key, 6)

    params = _make_params(k_p, emotion_dim, hidden_dim, state_dim, dtype)

    # Emulate the emotional_context dict: sorted keys -> value vector (1, emotion_dim)
    emotional_context = {f"emotion_{i}": float(v)
                         for i, v in enumerate(jax.random.uniform(k_e, (emotion_dim,)))}
    keys_sorted = sorted(emotional_context.keys())
    emotion_vec = jnp.array([[emotional_context[k] for k in keys_sorted]], dtype=dtype)

    # --- case 1: batch=2, S=32 -> lane-dense flatten path with pad+slice -------
    x1 = jax.random.normal(k_x1, (2, state_dim), dtype)
    o1 = jax.block_until_ready(emotional_gate(x1, emotion_vec, params))
    r1 = emotional_gate_ref(x1, emotion_vec, params)
    assert o1.shape == x1.shape
    assert jnp.allclose(o1, r1, atol=1e-5, rtol=1e-5), "mismatch (padded flatten path)"

    # --- case 2: batch=64, S=32 -> lane-dense flatten path, no padding ---------
    x2 = jax.random.normal(k_x2, (64, state_dim), dtype)
    o2 = jax.block_until_ready(emotional_gate(x2, emotion_vec, params))
    r2 = emotional_gate_ref(x2, emotion_vec, params)
    assert o2.shape == x2.shape
    assert jnp.allclose(o2, r2, atol=1e-5, rtol=1e-5), "mismatch (flatten path)"

    # --- case 2b: same data through the two-pass (non-fused) fallback ----------
    o2b = jax.block_until_ready(emotional_gate(x2, emotion_vec, params, fuse=False))
    assert jnp.allclose(o2b, r2, atol=1e-5, rtol=1e-5), "mismatch (two-pass path)"

    # --- case 3: S=128 (lane-multiple), batch=40 -> direct (B,S) path, 2-step grid
    params_128 = _make_params(k_p2, emotion_dim, hidden_dim, 128, dtype)
    x3 = jax.random.normal(k_x3, (40, 128), dtype)
    o3 = jax.block_until_ready(emotional_gate(x3, emotion_vec, params_128))
    r3 = emotional_gate_ref(x3, emotion_vec, params_128)
    assert o3.shape == x3.shape
    assert jnp.allclose(o3, r3, atol=1e-5, rtol=1e-5), "mismatch (direct path)"

    print("KERNEL_OK")
</pallas_src>

<mosaic_0001>
module attributes {stable_mosaic.version = 11 : i64} {
  func.func @_fused_gate_mul_kernel(%arg0: i32, %arg1: memref<1x8xf32, #tpu.memory_space<vmem>>, %arg2: memref<8x32xf32, #tpu.memory_space<vmem>>, %arg3: memref<1x32xf32, #tpu.memory_space<vmem>>, %arg4: memref<1x32xf32, #tpu.memory_space<vmem>>, %arg5: memref<1x32xf32, #tpu.memory_space<vmem>>, %arg6: memref<32x128xf32, #tpu.memory_space<vmem>>, %arg7: memref<1x128xf32, #tpu.memory_space<vmem>>, %arg8: memref<1x128xf32, #tpu.memory_space<vmem>>, %arg9: memref<1x128xf32, #tpu.memory_space<vmem>>) attributes {dimension_semantics = [#tpu.dimension_semantics<parallel>], iteration_bounds = array<i64: 1>, scalar_prefetch = 0 : i64, scratch_operands = 0 : i64, tpu.core_type = #tpu.core_type<tc>, window_params = [{pipeline_mode = #tpu.pipeline_mode<synchronous>, transform_indices = @transform_0, window_bounds = array<i64: 1, 8>}, {pipeline_mode = #tpu.pipeline_mode<synchronous>, transform_indices = @transform_1, window_bounds = array<i64: 8, 32>}, {pipeline_mode = #tpu.pipeline_mode<synchronous>, transform_indices = @transform_2, window_bounds = array<i64: 1, 32>}, {pipeline_mode = #tpu.pipeline_mode<synchronous>, transform_indices = @transform_3, window_bounds = array<i64: 1, 32>}, {pipeline_mode = #tpu.pipeline_mode<synchronous>, transform_indices = @transform_4, window_bounds = array<i64: 1, 32>}, {pipeline_mode = #tpu.pipeline_mode<synchronous>, transform_indices = @transform_5, window_bounds = array<i64: 32, 128>}, {pipeline_mode = #tpu.pipeline_mode<synchronous>, transform_indices = @transform_6, window_bounds = array<i64: 1, 128>}, {transform_indices = @transform_7, window_bounds = array<i64: 1, 128>}, {transform_indices = @transform_8, window_bounds = array<i64: 1, 128>}]} {
    %c0 = arith.constant 0 : index
    %c0_0 = arith.constant 0 : index
    %0 = vector.load %arg1[%c0, %c0_0] : memref<1x8xf32, #tpu.memory_space<vmem>>, vector<1x8xf32>
    %c0_1 = arith.constant 0 : index
    %c0_2 = arith.constant 0 : index
    %1 = vector.load %arg2[%c0_1, %c0_2] : memref<8x32xf32, #tpu.memory_space<vmem>>, vector<8x32xf32>
    %c0_3 = arith.constant 0 : index
    %c0_4 = arith.constant 0 : index
    %2 = vector.load %arg3[%c0_3, %c0_4] : memref<1x32xf32, #tpu.memory_space<vmem>>, vector<1x32xf32>
    %c0_5 = arith.constant 0 : index
    %c0_6 = arith.constant 0 : index
    %3 = vector.load %arg4[%c0_5, %c0_6] : memref<1x32xf32, #tpu.memory_space<vmem>>, vector<1x32xf32>
    %c0_7 = arith.constant 0 : index
    %c0_8 = arith.constant 0 : index
    %4 = vector.load %arg5[%c0_7, %c0_8] : memref<1x32xf32, #tpu.memory_space<vmem>>, vector<1x32xf32>
    %c0_9 = arith.constant 0 : index
    %c0_10 = arith.constant 0 : index
    %5 = vector.load %arg6[%c0_9, %c0_10] : memref<32x128xf32, #tpu.memory_space<vmem>>, vector<32x128xf32>
    %c0_11 = arith.constant 0 : index
    %c0_12 = arith.constant 0 : index
    %6 = vector.load %arg7[%c0_11, %c0_12] : memref<1x128xf32, #tpu.memory_space<vmem>>, vector<1x128xf32>
    %cst = arith.constant dense<0.000000e+00> : vector<1x32xf32>
    %7 = tpu.matmul %0, %1, %cst {dimension_numbers = #tpu.dot_dimension_numbers<[1], [0], [0], [1], [0, 0, 1, 1], [], []>} : vector<1x8xf32>, vector<8x32xf32>, vector<1x32xf32> -> vector<1x32xf32>
    %8 = arith.addf %7, %2 : vector<1x32xf32>
    %cst_13 = arith.constant dense<0.000000e+00> : vector<1xf32>
    %9 = vector.multi_reduction <add>, %8, %cst_13 [1] : vector<1x32xf32> to vector<1xf32>
    %10 = vector.shape_cast %9 : vector<1xf32> to vector<1x1xf32>
    %cst_14 = arith.constant 3.200000e+01 : f32
    %11 = vector.broadcast %cst_14 : f32 to vector<1x1xf32>
    %12 = arith.divf %10, %11 : vector<1x1xf32>
    %13 = vector.broadcast %12 : vector<1x1xf32> to vector<1x32xf32>
    %14 = arith.subf %8, %13 : vector<1x32xf32>
    %15 = vector.broadcast %12 : vector<1x1xf32> to vector<1x32xf32>
    %16 = arith.subf %8, %15 : vector<1x32xf32>
    %17 = arith.mulf %14, %16 : vector<1x32xf32>
    %cst_15 = arith.constant dense<0.000000e+00> : vector<1xf32>
    %18 = vector.multi_reduction <add>, %17, %cst_15 [1] : vector<1x32xf32> to vector<1xf32>
    %19 = vector.shape_cast %18 : vector<1xf32> to vector<1x1xf32>
    %cst_16 = arith.constant 3.200000e+01 : f32
    %20 = vector.broadcast %cst_16 : f32 to vector<1x1xf32>
    %21 = arith.divf %19, %20 : vector<1x1xf32>
    %22 = vector.broadcast %12 : vector<1x1xf32> to vector<1x32xf32>
    %23 = arith.subf %8, %22 : vector<1x32xf32>
    %cst_17 = arith.constant 9.99999974E-6 : f32
    %24 = vector.broadcast %cst_17 : f32 to vector<1x1xf32>
    %25 = arith.addf %21, %24 : vector<1x1xf32>
    %26 = math.rsqrt %25 : vector<1x1xf32>
    %27 = vector.broadcast %26 : vector<1x1xf32> to vector<1x32xf32>
    %28 = arith.mulf %23, %27 : vector<1x32xf32>
    %29 = arith.mulf %28, %3 : vector<1x32xf32>
    %30 = arith.addf %29, %4 : vector<1x32xf32>
    %cst_18 = arith.constant 5.000000e-01 : f32
    %31 = vector.broadcast %cst_18 : f32 to vector<1x32xf32>
    %32 = arith.mulf %31, %30 : vector<1x32xf32>
    %cst_19 = arith.constant 0.707106769 : f32
    %33 = vector.broadcast %cst_19 : f32 to vector<1x32xf32>
    %34 = arith.mulf %30, %33 : vector<1x32xf32>
    %35 = math.erf %34 : vector<1x32xf32>
    %cst_20 = arith.constant 1.000000e+00 : f32
    %36 = vector.broadcast %cst_20 : f32 to vector<1x32xf32>
    %37 = arith.addf %36, %35 : vector<1x32xf32>
    %38 = arith.mulf %32, %37 : vector<1x32xf32>
    %cst_21 = arith.constant dense<0.000000e+00> : vector<1x128xf32>
    %39 = tpu.matmul %38, %5, %cst_21 {dimension_numbers = #tpu.dot_dimension_numbers<[1], [0], [0], [1], [0, 0, 1, 1], [], []>} : vector<1x32xf32>, vector<32x128xf32>, vector<1x128xf32> -> vector<1x128xf32>
    %40 = arith.addf %39, %6 : vector<1x128xf32>
    %41 = arith.negf %40 : vector<1x128xf32>
    %42 = math.exp %41 : vector<1x128xf32>
    %cst_22 = arith.constant 1.000000e+00 : f32
    %43 = vector.broadcast %cst_22 : f32 to vector<1x128xf32>
    %44 = arith.addf %43, %42 : vector<1x128xf32>
    %45 = arith.divf %43, %44 : vector<1x128xf32>
    %c0_23 = arith.constant 0 : index
    %c0_24 = arith.constant 0 : index
    %46 = vector.load %arg8[%c0_23, %c0_24] : memref<1x128xf32, #tpu.memory_space<vmem>>, vector<1x128xf32>
    %47 = arith.mulf %46, %45 : vector<1x128xf32>
    %c0_25 = arith.constant 0 : index
    %c0_26 = arith.constant 0 : index
    %48 = vector.load %arg9[%c0_25, %c0_26] : memref<1x128xf32, #tpu.memory_space<vmem>>, vector<1x128xf32>
    tpu.vector_store %arg9[%c0_25, %c0_26], %47 {strides = array<i32>} : memref<1x128xf32, #tpu.memory_space<vmem>>, vector<1x128xf32>,
    return
  }
  func.func @transform_0(%arg0: i32) -> (i32, i32) {
    %c0_i32 = arith.constant 0 : i32
    %c0_i32_0 = arith.constant 0 : i32
    %c0_i32_1 = arith.constant 0 : i32
    return %c0_i32, %c0_i32_0 : i32, i32
  }
  func.func @transform_1(%arg0: i32) -> (i32, i32) {
    %c0_i32 = arith.constant 0 : i32
    %c0_i32_0 = arith.constant 0 : i32
    %c0_i32_1 = arith.constant 0 : i32
    return %c0_i32, %c0_i32_0 : i32, i32
  }
  func.func @transform_2(%arg0: i32) -> (i32, i32) {
    %c0_i32 = arith.constant 0 : i32
    %c0_i32_0 = arith.constant 0 : i32
    %c0_i32_1 = arith.constant 0 : i32
    return %c0_i32, %c0_i32_0 : i32, i32
  }
  func.func @transform_3(%arg0: i32) -> (i32, i32) {
    %c0_i32 = arith.constant 0 : i32
    %c0_i32_0 = arith.constant 0 : i32
    %c0_i32_1 = arith.constant 0 : i32
    return %c0_i32, %c0_i32_0 : i32, i32
  }
  func.func @transform_4(%arg0: i32) -> (i32, i32) {
    %c0_i32 = arith.constant 0 : i32
    %c0_i32_0 = arith.constant 0 : i32
    %c0_i32_1 = arith.constant 0 : i32
    return %c0_i32, %c0_i32_0 : i32, i32
  }
  func.func @transform_5(%arg0: i32) -> (i32, i32) {
    %c0_i32 = arith.constant 0 : i32
    %c0_i32_0 = arith.constant 0 : i32
    %c0_i32_1 = arith.constant 0 : i32
    return %c0_i32, %c0_i32_0 : i32, i32
  }
  func.func @transform_6(%arg0: i32) -> (i32, i32) {
    %c0_i32 = arith.constant 0 : i32
    %c0_i32_0 = arith.constant 0 : i32
    %c0_i32_1 = arith.constant 0 : i32
    return %c0_i32, %c0_i32_0 : i32, i32
  }
  func.func @transform_7(%arg0: i32) -> (i32, i32) {
    %c0_i32 = arith.constant 0 : i32
    %c0_i32_0 = arith.constant 0 : i32
    return %arg0, %c0_i32 : i32, i32
  }
  func.func @transform_8(%arg0: i32) -> (i32, i32) {
    %c0_i32 = arith.constant 0 : i32
    %c0_i32_0 = arith.constant 0 : i32
    return %arg0, %c0_i32 : i32, i32
  }
}

</mosaic_0001>

<llo_original>
// kernel: tpu_custom_call.1
$region0: #{tpu_custom_call.1}
  #allocation0 [shape = 'u32[]', space=smem, size = 0x4, offset = 0x4, fixed_abs, tag = 'smem constant byte address 0x4 - core index']
  #allocation1 [shape = 'u32[72,128]{1,0:T(1,128)}', space=vmem, size = 0x9000, scoped, tag = 'internal scratch']
  %s0 = inlined_call_operand.hbm [shape: f32[1,8], index: 0, kind: input, shape index: {}]
  %s1 = inlined_call_operand.hbm [shape: f32[8,32], index: 1, kind: input, shape index: {}]
  %s2 = inlined_call_operand.vmem [shape: f32[1,32], index: 2, kind: input, shape index: {}]
  %s3 = inlined_call_operand.vmem [shape: f32[1,32], index: 3, kind: input, shape index: {}]
  %s4 = inlined_call_operand.vmem [shape: f32[1,32], index: 4, kind: input, shape index: {}]
  %s5 = inlined_call_operand.hbm [shape: f32[32,128], index: 5, kind: input, shape index: {}]
  %s6 = inlined_call_operand.vmem [shape: f32[1,128], index: 6, kind: input, shape index: {}]
  %s7 = inlined_call_operand.vmem [shape: f32[1,128], index: 7, kind: input, shape index: {}]
  %s8 = inlined_call_operand.hbm [shape: f32[1,128], index: 8, kind: output, shape index: {}]
  %s9 = sld [smem:[#allocation0]]
  $region54: #{tpu_custom_call.1} parent=0
    _
  %s11 = ssub.s32 1, %s9
  %s12 = scalar_select 0, %s11, %s9
  $region1: #{tpu_custom_call.1} parent=0
    #allocation2 [shape = 'u8[512]{0}', space=vmem, size = 0x400, scoped, tag = 'input window, operand 0, single buffered']
    #allocation3 [shape = 's32[1]{0}', space=sflag, size = 0x4, scoped, tag = 'scoped memory for tpu_custom_call.1']
    #allocation4 [shape = 's32[1]{0}', space=sflag, size = 0x4, scoped, tag = 'scoped memory for tpu_custom_call.1']
    #allocation5 [shape = 'u8[4096]{0}', space=vmem, size = 0x1000, scoped, tag = 'input window, operand 1, single buffered']
    #allocation6 [shape = 's32[1]{0}', space=sflag, size = 0x4, scoped, tag = 'scoped memory for tpu_custom_call.1']
    #allocation7 [shape = 'u8[16384]{0}', space=vmem, size = 0x4000, scoped, tag = 'input window, operand 5, single buffered']
    #allocation8 [shape = 'u8[512]{0}', space=vmem, size = 0x400, scoped, tag = 'output window, operand 0, single buffered']
    %13 = vsyncpa [#allocation3], 0
    %14 = vsyncpa [#allocation6], 0
    %15 = vsyncpa [#allocation4], 0
    // Predicated region
    $region2: #{tpu_custom_call.1} parent=1 // pred_check
      _
    $region3: #{tpu_custom_call.1} parent=1 // pred_check_branch
      %17 = sbr.rel (0) target = $region5
    $region4: #{tpu_custom_call.1} parent=1 // pred_region
      %19 = vsyncadd [#allocation3], 0
      %s21 = sshll.u32 %s0, 4
      %s22 = int_to_ptr.hbm [resolvable:$true] %s21
      %s23 = sshll.u32 [#allocation2], 4
      %s24 = int_to_ptr.vmem [resolvable:$true] %s23
      %26 = dma.hbm_to_vmem [thread:$0]  %s22, 16, %s24, [#allocation3]
    $region5: #{tpu_custom_call.1} parent=1 // pred_fallthru
      _
    // Predicated region
    $region6: #{tpu_custom_call.1} parent=1 // pred_check
      _
    $region7: #{tpu_custom_call.1} parent=1 // pred_check_branch
      %28 = sbr.rel (0) target = $region9
    $region8: #{tpu_custom_call.1} parent=1 // pred_region
      %30 = vsyncadd [#allocation6], 0
      %s32 = sshll.u32 %s1, 4
      %s33 = int_to_ptr.hbm [resolvable:$true] %s32
      %s34 = sshll.u32 [#allocation5], 4
      %s35 = int_to_ptr.vmem [resolvable:$true] %s34
      %37 = dma.hbm_to_vmem [thread:$0]  %s33, 128, %s35, [#allocation6]
    $region9: #{tpu_custom_call.1} parent=1 // pred_fallthru
      _
    // Predicated region
    $region10: #{tpu_custom_call.1} parent=1 // pred_check
      _
    $region11: #{tpu_custom_call.1} parent=1 // pred_check_branch
      %39 = sbr.rel (0) target = $region13
    $region12: #{tpu_custom_call.1} parent=1 // pred_region
      _
    $region13: #{tpu_custom_call.1} parent=1 // pred_fallthru
      _
    // Predicated region
    $region14: #{tpu_custom_call.1} parent=1 // pred_check
      _
    $region15: #{tpu_custom_call.1} parent=1 // pred_check_branch
      %41 = sbr.rel (0) target = $region17
    $region16: #{tpu_custom_call.1} parent=1 // pred_region
      _
    $region17: #{tpu_custom_call.1} parent=1 // pred_fallthru
      _
    // Predicated region
    $region18: #{tpu_custom_call.1} parent=1 // pred_check
      _
    $region19: #{tpu_custom_call.1} parent=1 // pred_check_branch
      %43 = sbr.rel (0) target = $region21
    $region20: #{tpu_custom_call.1} parent=1 // pred_region
      _
    $region21: #{tpu_custom_call.1} parent=1 // pred_fallthru
      _
    // Predicated region
    $region22: #{tpu_custom_call.1} parent=1 // pred_check
      _
    $region23: #{tpu_custom_call.1} parent=1 // pred_check_branch
      %45 = sbr.rel (0) target = $region25
    $region24: #{tpu_custom_call.1} parent=1 // pred_region
      %47 = vsyncadd [#allocation6], 0
      %s48 = sshll.u32 %s5, 4
      %s49 = int_to_ptr.hbm [resolvable:$true] %s48
      %s50 = sshll.u32 [#allocation7], 4
      %s51 = int_to_ptr.vmem [resolvable:$true] %s50
      %56 = dma.hbm_to_vmem [thread:$0]  %s49, 512, %s51, [#allocation6], 128, 128, 8
    $region25: #{tpu_custom_call.1} parent=1 // pred_fallthru
      _
    // Predicated region
    $region26: #{tpu_custom_call.1} parent=1 // pred_check
      _
    $region27: #{tpu_custom_call.1} parent=1 // pred_check_branch
      %58 = sbr.rel (0) target = $region29
    $region28: #{tpu_custom_call.1} parent=1 // pred_region
      _
    $region29: #{tpu_custom_call.1} parent=1 // pred_fallthru
      _
    // Predicated region
    $region30: #{tpu_custom_call.1} parent=1 // pred_check
      _
    $region31: #{tpu_custom_call.1} parent=1 // pred_check_branch
      %60 = sbr.rel (0) target = $region33
    $region32: #{tpu_custom_call.1} parent=1 // pred_region
      _
    $region33: #{tpu_custom_call.1} parent=1 // pred_fallthru
      _
    // Predicated region
    $region34: #{tpu_custom_call.1} parent=1 // pred_check
      _
    $region35: #{tpu_custom_call.1} parent=1 // pred_check_branch
      %62 = sbr.rel (0) target = $region37
    $region36: #{tpu_custom_call.1} parent=1 // pred_region
      %64 = dma.done [#allocation3], 16
    $region37: #{tpu_custom_call.1} parent=1 // pred_fallthru
      _
    // Predicated region
    $region38: #{tpu_custom_call.1} parent=1 // pred_check
      _
    $region39: #{tpu_custom_call.1} parent=1 // pred_check_branch
      %66 = sbr.rel (0) target = $region41
    $region40: #{tpu_custom_call.1} parent=1 // pred_region
      %68 = dma.done [#allocation6], 128
    $region41: #{tpu_custom_call.1} parent=1 // pred_fallthru
      _
    // Predicated region
    $region42: #{tpu_custom_call.1} parent=1 // pred_check
      _
    $region43: #{tpu_custom_call.1} parent=1 // pred_check_branch
      %70 = sbr.rel (0) target = $region45
    $region44: #{tpu_custom_call.1} parent=1 // pred_region
      %72 = dma.done [#allocation6], 512
    $region45: #{tpu_custom_call.1} parent=1 // pred_fallthru
      _
    %v73 = vld [vmem:[#allocation2] sm:$0x1]
    %v74 = vld [vmem:[#allocation5] sm:$0xff]
    %v75 = vld [vmem:[%s2] sm:$0x1]
    %v76 = vld [vmem:[%s3] sm:$0x1]
    %v77 = vld [vmem:[%s4] sm:$0x1]
    %v78 = vld [vmem:[#allocation7] sm:$0xff]
    %v79 = vld [vmem:[#allocation7 + $0x8] sm:$0xff]
    %v80 = vld [vmem:[#allocation7 + $0x10] sm:$0xff]
    %v81 = vld [vmem:[#allocation7 + $0x18] sm:$0xff]
    %v82 = vld [vmem:[%s6] sm:$0x1]
    %vm83 = vcmask 64512
    %v85 = vsel %vm83, %v73, 0
    %87 = vmatpush.msra.mxu0 0.0
    %88 = vmatpush.msra.mxu0 0.0
    %89 = vmatpush.msra.mxu0 0.0
    %90 = vmatpush.msra.mxu0 0.0
    %91 = vmatpush.msra.mxu0 0.0
    %92 = vmatpush.msra.mxu0 0.0
    %93 = vmatpush.msra.mxu0 0.0
    %94 = vmatpush.msra.mxu0 0.0
    %95 = vmatpush.msra.mxu0 0.0
    %96 = vmatpush.msra.mxu0 0.0
    %97 = vmatpush.msra.mxu0 0.0
    %98 = vmatpush.msra.mxu0 0.0
    %99 = vmatpush.msra.mxu0 0.0
    %100 = vmatpush.msra.mxu0 0.0
    %101 = vmatpush.msra.mxu0 0.0
    %102 = vmatpush.msra.mxu0 %v74
    %103 = vmatmul.f32.gmra.mxu0 %v85
    %v104 = vpop.f32.mrf.mxu0
    %v105 = vadd.f32 %v75, %v104
    %106 = vdwg.mxu0
    %vm107 = vcmask 253952
    %v108 = vsel %vm107, %v105, 0.0
    %109 = vadd.xlane.f32.xlu0 %v108
    %v110 = vpop.xlane.xlu0 %109
    %v111 = vrcp.pop 32.0
    %v112 = vmul.f32 32.0, %v111
    %v113 = vsub.f32 1.0, %v112
    %v114 = vmul.f32 %v111, %v113
    %v115 = vadd.f32 %v111, %v114
    %vm116 = vweird.f32 %v111
    %v117 = vsel %vm116, %v111, %v115
    %v118 = vmul.f32 %v110, %v117
    %v119 = vsub.f32 %v105, %v118
    %v120 = vmul.f32 %v119, %v119
    %v121 = vsel %vm107, %v120, 0.0
    %122 = vadd.xlane.f32.xlu0 %v121
    %v123 = vpop.xlane.xlu0 %122
    %v124 = vmul.f32 %v123, %v117
    %v125 = vadd.f32 %v124, 1e-05
    %v126 = vrsqrt.pop %v125
    %v127 = vmul.f32 %v126, %v125
    %v128 = vmul.f32 %v127, %v126
    %v129 = vmul.f32 0.5, %v128
    %v130 = vsub.f32 1.5, %v129
    %v131 = vmul.f32 %v126, %v130
    %vm132 = vweird.f32 %v125
    %vm133 = vweird.f32 %v126
    %vm134 = vmor %vm132, %vm133
    %v135 = vsel %vm134, %v126, %v131
    %v136 = vmul.f32 %v119, %v135
    %v137 = vmul.f32 %v136, %v76
    %v138 = vadd.f32 %v137, %v77
    %v139 = vmul.f32 %v138, 0.5
    %v140 = vmul.f32 %v138, 0.70710677
    %v141 = vmul.f32 %v140, %v140
    %v142 = vmin.f32 16.0, %v141
    %v143 = vmul.f32 %v142, 2.1237322e-06
    %v144 = vadd.f32 %v143, 0.00028619796
    %v145 = vmul.f32 %v142, %v144
    %v146 = vadd.f32 %v145, 0.0036580483
    %v147 = vmul.f32 %v142, %v146
    %v148 = vadd.f32 %v147, 0.05243302
    %v149 = vmul.f32 %v142, %v148
    %v150 = vadd.f32 %v149, 0.18741608
    %v151 = vmul.f32 %v142, %v150
    %v152 = vadd.f32 %v151, 1.1283791
    %v153 = vmul.f32 %v140, %v152
    %v154 = vmul.f32 %v142, 3.8918573e-05
    %v155 = vadd.f32 %v154, 0.001143296
    %v156 = vmul.f32 %v142, %v155
    %v157 = vadd.f32 %v156, 0.014752088
    %v158 = vmul.f32 %v142, %v157
    %v159 = vadd.f32 %v158, 0.112945676
    %v160 = vmul.f32 %v142, %v159
    %v161 = vadd.f32 %v160, 0.4994258
    %v162 = vmul.f32 %v142, %v161
    %v163 = vadd.f32 %v162, 1.0
    %v164 = vrcp.pop %v163
    %v165 = vmul.f32 %v163, %v164
    %v166 = vsub.f32 1.0, %v165
    %v167 = vmul.f32 %v164, %v166
    %v168 = vadd.f32 %v164, %v167
    %vm169 = vweird.f32 %v163
    %vm170 = vweird.f32 %v164
    %vm171 = vmor %vm169, %vm170
    %v172 = vsel %vm171, %v164, %v168
    %v173 = vand.u32 2147483647, %v163
    %vm174 = vcmp.eq.f32.partialorder %v173, 8.507059e+37
    %v175 = vand.u32 %v163, 2147483648
    %v176 = vor.u32 1.1754944e-38, %v175
    %v177 = vsel %vm174, %v176, %v172
    %v178 = vmul.f32 %v153, %v177
    %v179 = vmin.f32 %v178, 1.0
    %v180 = vmax.f32 %v179, -1.0
    %v181 = vadd.f32 %v180, 1.0
    %v182 = vmul.f32 %v139, %v181
    %vm183 = vcmask 261120
    %v185 = vsel %vm183, %v182, 0
    %187 = vmatpush.msra.mxu0 0.0
    %188 = vmatpush.msra.mxu0 0.0
    %189 = vmatpush.msra.mxu0 0.0
    %190 = vmatpush.msra.mxu0 0.0
    %191 = vmatpush.msra.mxu0 0.0
    %192 = vmatpush.msra.mxu0 0.0
    %193 = vmatpush.msra.mxu0 0.0
    %194 = vmatpush.msra.mxu0 0.0
    %195 = vmatpush.msra.mxu0 0.0
    %196 = vmatpush.msra.mxu0 0.0
    %197 = vmatpush.msra.mxu0 0.0
    %198 = vmatpush.msra.mxu0 0.0
    %199 = vmatpush.msra.mxu0 %v81
    %200 = vmatpush.msra.mxu0 %v80
    %201 = vmatpush.msra.mxu0 %v79
    %202 = vmatpush.msra.mxu0 %v78
    %203 = vmatmul.f32.gmra.mxu0 %v185
    %v204 = vpop.f32.mrf.mxu0
    %v205 = vadd.f32 %v82, %v204
    %206 = vdwg.mxu0
    %v207 = vxor.u32 %v205, 2147483648
    %v208 = vmul.f32 %v207, 1.442695
    %v209 = vpow.pop %v208
    %v210 = vadd.f32 %v209, 1.0
    %v211 = vrcp.pop %v210
    %v212 = vmul.f32 %v210, %v211
    %v213 = vsub.f32 1.0, %v212
    %v214 = vmul.f32 %v211, %v213
    %v215 = vadd.f32 %v211, %v214
    %vm216 = vweird.f32 %v210
    %vm217 = vweird.f32 %v211
    %vm218 = vmor %vm216, %vm217
    %v219 = vsel %vm218, %v211, %v215
    %v220 = vand.u32 2147483647, %v210
    %vm221 = vcmp.eq.f32.partialorder %v220, 8.507059e+37
    %v222 = vand.u32 %v210, 2147483648
    %v223 = vor.u32 1.1754944e-38, %v222
    %v224 = vsel %vm221, %v223, %v219
    %v225 = vmul.f32 1.0, %v224
    %v226 = vld [vmem:[%s7] sm:$0x1]
    %v227 = vmul.f32 %v226, %v225
    %228 = vst [vmem:[#allocation8] sm:$0x1] %v227
    // Predicated region
    $region46: #{tpu_custom_call.1} parent=1 // pred_check
      _
    $region47: #{tpu_custom_call.1} parent=1 // pred_check_branch
      %230 = sbr.rel (0) target = $region49
    $region48: #{tpu_custom_call.1} parent=1 // pred_region
      %232 = vsyncadd [#allocation4], 0
      %s234 = sshll.u32 [#allocation8], 4
      %s235 = int_to_ptr.vmem [resolvable:$true] %s234
      %s236 = sshll.u32 %s8, 4
      %s237 = int_to_ptr.hbm [resolvable:$true] %s236
      %239 = dma.vmem_to_hbm [thread:$0]  %s235, 16, %s237, [#allocation4]
    $region49: #{tpu_custom_call.1} parent=1 // pred_fallthru
      _
    // Predicated region
    $region50: #{tpu_custom_call.1} parent=1 // pred_check
      _
    $region51: #{tpu_custom_call.1} parent=1 // pred_check_branch
      %241 = sbr.rel (0) target = $region53
    $region52: #{tpu_custom_call.1} parent=1 // pred_region
      %243 = dma.done [#allocation4], 16
    $region53: #{tpu_custom_call.1} parent=1 // pred_fallthru
      _
    %244 = vsyncpa [#allocation3], 1
    %245 = vsyncpa [#allocation6], 1
    %246 = vsyncpa [#allocation4], 1

</llo_original>
